<compile_context>
chip_gen: v5e
topology: v5e:2x2
jax: 0.10.0
libtpu: 0.0.40
codegen_flags: <defaults>
</compile_context>

<pallas_src>
import math

import jax
import jax.numpy as jnp
from jax.experimental import pallas as pl
from jax.experimental.pallas import tpu as pltpu


def _input_layer_kernel(x_ref, w_ref, b_ref, pe_ref, o_ref):
    # x_ref : [TM, E]   bf16 row tile (TM = rows per grid step, multiple of B)
    # w_ref : [E, Dp]   bf16 Linear weight, pre-transposed; resident across grid
    # b_ref : [1, Dp]   f32 Linear bias; resident
    # pe_ref: [B, Dp]   f32 positional-encoding table (pe[0]); resident
    # o_ref : [TM, Dp]  f32 output tile
    y = jnp.dot(x_ref[...], w_ref[...], preferred_element_type=jnp.float32)  # MXU, f32 acc
    y = jnp.maximum(y + b_ref[...], 0.0)                                     # bias + ReLU

    # Rows of a tile cycle through batch indices 0..B-1 (TM is a multiple of B),
    # so the PE add is a clean in-VMEM repeat of the small [B, Dp] table.
    b, dp = pe_ref.shape
    reps = o_ref.shape[0] // b
    pe_tile = jnp.broadcast_to(pe_ref[...][None, :, :], (reps, b, dp)).reshape(o_ref.shape)
    o_ref[...] = (y + pe_tile).astype(o_ref.dtype)


def input_layer_forward(src, weight, bias, pe, *, block_rows=256):
    """src: [S, B, E] f32; weight: [D, E]; bias: [D]; pe: [1, max_len, D].

    Returns [S, B, D] f32, matching InputLayer.forward (eval mode).
    block_rows ~256 is a v7x-safe (64 MiB VMEM) default; on v5e/v6e it can be
    raised toward 512-1024 (optionally with vmem_limit_bytes) for more overlap.
    """
    S, B, E = src.shape
    D = weight.shape[0]
    max_len = pe.shape[1]
    assert B == max_len, (
        "literal PyTorch broadcast x + pe[:S] requires batch == max_len "
        f"(got B={B}, max_len={max_len})"
    )

    # Lane-dense output: pad D up to a multiple of 128 (sliced off afterwards).
    Dp = ((D + 127) // 128) * 128
    M = S * B

    # Row tile: a multiple of B (so the PE table repeats cleanly per tile),
    # sized near block_rows. Pad M so the grid divides evenly.
    reps = max(1, block_rows // B)
    TM = reps * B
    n_tiles = -(-M // TM)
    Mp = n_tiles * TM

    # bf16 activations/weights for the MXU; f32 accumulation + f32 epilogue.
    x2d = src.reshape(M, E).astype(jnp.bfloat16)
    if Mp != M:
        x2d = jnp.pad(x2d, ((0, Mp - M), (0, 0)))
    w_t = weight.T.astype(jnp.bfloat16)                 # [E, D]
    b2d = bias.reshape(1, D).astype(jnp.float32)        # [1, D]
    pe2d = pe[0].astype(jnp.float32)                    # [B, D]  (max_len == B)
    if Dp != D:
        w_t = jnp.pad(w_t, ((0, 0), (0, Dp - D)))
        b2d = jnp.pad(b2d, ((0, 0), (0, Dp - D)))
        pe2d = jnp.pad(pe2d, ((0, 0), (0, Dp - D)))

    out = pl.pallas_call(
        _input_layer_kernel,
        out_shape=jax.ShapeDtypeStruct((Mp, Dp), jnp.float32),
        grid=(n_tiles,),
        in_specs=[
            pl.BlockSpec((TM, E), lambda i: (i, 0)),    # streamed row tile
            pl.BlockSpec((E, Dp), lambda i: (0, 0)),    # resident W^T
            pl.BlockSpec((1, Dp), lambda i: (0, 0)),    # resident bias
            pl.BlockSpec((B, Dp), lambda i: (0, 0)),    # resident PE table
        ],
        out_specs=pl.BlockSpec((TM, Dp), lambda i: (i, 0)),
        compiler_params=pltpu.CompilerParams(
            # Row tiles are independent -> shardable across v7x's two TensorCores.
            dimension_semantics=("parallel",),
        ),
    )(x2d, w_t, b2d, pe2d)

    return out[:M, :D].reshape(S, B, D)


def make_positional_encoding(d_model, max_len):
    """Builds pe exactly like PositionalEncoding.__init__, shape (1, max_len, d_model)."""
    position = jnp.arange(0, max_len, dtype=jnp.float32)[:, None]            # [max_len, 1]
    div_term = jnp.exp(
        jnp.arange(0, d_model, 2, dtype=jnp.float32) * (-math.log(10000.0) / d_model)
    )                                                                         # [ceil(d/2)]
    ang = position * div_term                                                 # [max_len, ceil(d/2)]
    pe = jnp.zeros((max_len, d_model), dtype=jnp.float32)
    pe = pe.at[:, 0::2].set(jnp.sin(ang))
    if d_model % 2 != 0:
        pe = pe.at[:, 1::2].set(jnp.cos(ang)[:, :-1])
    else:
        pe = pe.at[:, 1::2].set(jnp.cos(ang))
    return pe[None, :, :]                                                     # (1, max_len, d_model)


if __name__ == "__main__":
    # Small shapes consistent with the module's forward; B == max_len is
    # required by the literal pe broadcast. block_rows=128 -> grid of 4 tiles.
    S = 64        # sequence length
    B = 8         # batch size (== max_len)
    E = 64        # embedding_size
    D = 128       # d_model
    MAX_LEN = B

    key = jax.random.PRNGKey(0)
    k_src, k_w = jax.random.split(key)

    src = jax.random.normal(k_src, (S, B, E), dtype=jnp.float32)

    # Deterministic parameter init mimicking InputLayer.init_weights(initrange=0.1).
    weight = jax.random.uniform(k_w, (D, E), dtype=jnp.float32, minval=-0.1, maxval=0.1)
    bias = jnp.zeros((D,), dtype=jnp.float32)
    pe = make_positional_encoding(D, MAX_LEN)

    out = input_layer_forward(src, weight, bias, pe, block_rows=128)
    out = jax.block_until_ready(out)

    # Pure-JAX f32 reference of the exact PyTorch forward (eval mode).
    ref = jnp.maximum(jnp.einsum("sbe,de->sbd", src, weight) + bias, 0.0)
    ref = ref + pe[:S, :]   # literal pe[:x.size(0), :] broadcast

    assert out.shape == (S, B, D)
    # Loosened tolerance: kernel uses bf16 matmul inputs with f32 accumulation.
    max_err = float(jnp.max(jnp.abs(out - ref)))
    assert jnp.allclose(out, ref, atol=3e-2, rtol=3e-2), f"mismatch vs reference (max abs err {max_err})"

    print("KERNEL_OK")
</pallas_src>

<mosaic_0001>
module attributes {stable_mosaic.version = 11 : i64} {
  func.func @_input_layer_kernel(%arg0: i32, %arg1: memref<128x64xbf16, #tpu.memory_space<vmem>>, %arg2: memref<64x128xbf16, #tpu.memory_space<vmem>>, %arg3: memref<1x128xf32, #tpu.memory_space<vmem>>, %arg4: memref<8x128xf32, #tpu.memory_space<vmem>>, %arg5: memref<128x128xf32, #tpu.memory_space<vmem>>) attributes {dimension_semantics = [#tpu.dimension_semantics<parallel>], iteration_bounds = array<i64: 4>, scalar_prefetch = 0 : i64, scratch_operands = 0 : i64, tpu.core_type = #tpu.core_type<tc>, window_params = [{transform_indices = @transform_0, window_bounds = array<i64: 128, 64>}, {pipeline_mode = #tpu.pipeline_mode<synchronous>, transform_indices = @transform_1, window_bounds = array<i64: 64, 128>}, {pipeline_mode = #tpu.pipeline_mode<synchronous>, transform_indices = @transform_2, window_bounds = array<i64: 1, 128>}, {pipeline_mode = #tpu.pipeline_mode<synchronous>, transform_indices = @transform_3, window_bounds = array<i64: 8, 128>}, {transform_indices = @transform_4, window_bounds = array<i64: 128, 128>}]} {
    %c0 = arith.constant 0 : index
    %c0_0 = arith.constant 0 : index
    %0 = vector.load %arg1[%c0, %c0_0] : memref<128x64xbf16, #tpu.memory_space<vmem>>, vector<128x64xbf16>
    %c0_1 = arith.constant 0 : index
    %c0_2 = arith.constant 0 : index
    %1 = vector.load %arg2[%c0_1, %c0_2] : memref<64x128xbf16, #tpu.memory_space<vmem>>, vector<64x128xbf16>
    %cst = arith.constant dense<0.000000e+00> : vector<128x128xf32>
    %2 = tpu.matmul %0, %1, %cst {dimension_numbers = #tpu.dot_dimension_numbers<[1], [0], [0], [1], [0, 0, 1, 1], [], []>} : vector<128x64xbf16>, vector<64x128xbf16>, vector<128x128xf32> -> vector<128x128xf32>
    %c0_3 = arith.constant 0 : index
    %c0_4 = arith.constant 0 : index
    %3 = vector.load %arg3[%c0_3, %c0_4] : memref<1x128xf32, #tpu.memory_space<vmem>>, vector<1x128xf32>
    %4 = vector.broadcast %3 : vector<1x128xf32> to vector<128x128xf32>
    %5 = arith.addf %2, %4 : vector<128x128xf32>
    %cst_5 = arith.constant 0.000000e+00 : f32
    %6 = vector.broadcast %cst_5 : f32 to vector<128x128xf32>
    %7 = arith.maximumf %5, %6 : vector<128x128xf32>
    %c0_6 = arith.constant 0 : index
    %c0_7 = arith.constant 0 : index
    %8 = vector.load %arg4[%c0_6, %c0_7] : memref<8x128xf32, #tpu.memory_space<vmem>>, vector<8x128xf32>
    %9 = vector.shape_cast %8 : vector<8x128xf32> to vector<1x8x128xf32>
    %10 = vector.shape_cast %9 : vector<1x8x128xf32> to vector<1x8x128xf32>
    %11 = vector.broadcast %10 : vector<1x8x128xf32> to vector<16x8x128xf32>
    %12 = vector.shape_cast %11 : vector<16x8x128xf32> to vector<128x128xf32>
    %13 = arith.addf %7, %12 : vector<128x128xf32>
    %c0_8 = arith.constant 0 : index
    %c0_9 = arith.constant 0 : index
    %14 = vector.load %arg5[%c0_8, %c0_9] : memref<128x128xf32, #tpu.memory_space<vmem>>, vector<128x128xf32>
    tpu.vector_store %arg5[%c0_8, %c0_9], %13 {strides = array<i32>} : memref<128x128xf32, #tpu.memory_space<vmem>>, vector<128x128xf32>,
    return
  }
  func.func @transform_0(%arg0: i32) -> (i32, i32) {
    %c0_i32 = arith.constant 0 : i32
    %c0_i32_0 = arith.constant 0 : i32
    return %arg0, %c0_i32 : i32, i32
  }
  func.func @transform_1(%arg0: i32) -> (i32, i32) {
    %c0_i32 = arith.constant 0 : i32
    %c0_i32_0 = arith.constant 0 : i32
    %c0_i32_1 = arith.constant 0 : i32
    return %c0_i32, %c0_i32_0 : i32, i32
  }
  func.func @transform_2(%arg0: i32) -> (i32, i32) {
    %c0_i32 = arith.constant 0 : i32
    %c0_i32_0 = arith.constant 0 : i32
    %c0_i32_1 = arith.constant 0 : i32
    return %c0_i32, %c0_i32_0 : i32, i32
  }
  func.func @transform_3(%arg0: i32) -> (i32, i32) {
    %c0_i32 = arith.constant 0 : i32
    %c0_i32_0 = arith.constant 0 : i32
    %c0_i32_1 = arith.constant 0 : i32
    return %c0_i32, %c0_i32_0 : i32, i32
  }
  func.func @transform_4(%arg0: i32) -> (i32, i32) {
    %c0_i32 = arith.constant 0 : i32
    %c0_i32_0 = arith.constant 0 : i32
    return %arg0, %c0_i32 : i32, i32
  }
}

</mosaic_0001>

<llo_original>
// kernel: tpu_custom_call.1
$region0: #{tpu_custom_call.1}
  #allocation0 [shape = 'u32[]', space=smem, size = 0x4, offset = 0x4, fixed_abs, tag = 'smem constant byte address 0x4 - core index']
  #allocation1 [shape = 'u32[72,128]{1,0:T(1,128)}', space=vmem, size = 0x9000, scoped, tag = 'internal scratch']
  %s0 = inlined_call_operand.vmem [shape: bf16[512,64], index: 0, kind: input, shape index: {}]
  %s1 = inlined_call_operand.vmem [shape: bf16[64,128], index: 1, kind: input, shape index: {}]
  %s2 = inlined_call_operand.vmem [shape: f32[1,128], index: 2, kind: input, shape index: {}]
  %s3 = inlined_call_operand.vmem [shape: f32[8,128], index: 3, kind: input, shape index: {}]
  %s4 = inlined_call_operand.hbm [shape: f32[512,128], index: 4, kind: output, shape index: {}]
  %s5 = sld [smem:[#allocation0]]
  $region49: #{tpu_custom_call.1} parent=0
    _
  %s7 = ssub.s32 1, %s5
  %s8 = scalar_select 0, %s7, %s5
  $region1: #{tpu_custom_call.1} parent=0
    #allocation2 [shape = 'u8[131072]{0}', space=vmem, size = 0x20000, scoped, tag = 'output window, operand 0']
    #allocation3 [shape = 's32[2]{0}', space=sflag, size = 0x8, scoped, tag = 'scoped memory for tpu_custom_call.1']
    %9 = vsyncpa [#allocation3], 0
    %s10 = scalar_lea.sflag [#allocation3], 1
    %11 = vsyncpa %s10, 0
    loop: start=0, step=1, limit=6
    $region2: #{tpu_custom_call.1} parent=1 // loop_pre_header
      _
    $region3: #{tpu_custom_call.1} parent=1 // loop_header
      %s13 = sphi 0, %s17
      %p14 = scmp.ge.s32.totalorder %s13, 6
      %s23 = sphi 0, %s25
      %s26 = sphi 0, %s23
      %s27 = sphi 0, %s26
      %s43 = sphi 0, %s27
      %s47 = sphi 0, %s47
      %s49 = sphi 0, %s47
      %s50 = sphi 0, %s49
      %s64 = sphi 0, %s50
      %s68 = sphi 0, %s68
      %s70 = sphi 0, %s68
      %s71 = sphi 0, %s70
      %s85 = sphi 0, %s71
      %s89 = sphi 0, %s89
      %s91 = sphi 0, %s89
      %s92 = sphi 0, %s91
      %s106 = sphi 0, %s92
      %s112 = sphi 0, %s114
      %s115 = sphi 0, %s112
      %s116 = sphi 0, %s115
      %s132 = sphi 0, %s116
    $region4: #{tpu_custom_call.1} parent=1 // loop_header_branch
      %16 = sbr.rel (%p14) target = $region8
    $region5: #{tpu_custom_call.1} parent=1 // loop_body
      %s18 = ssub.s32 %s13, 1
      %s19 = ssub.s32 %s13, 2
      %s20 = sadd.s32 %s13, 1
      %s21 = ssub.s32 %s13, %s20
      %p22 = scmp.eq.s32.totalorder %s21, 0
      %s24 = sadd.s32 %s23, 1
      %s25 = scalar_select %p22, %s23, %s24
      %p28 = pneg %p22
      %p29 = scmp.eq.s32.totalorder %s13, 3
      %p30 = por %p28, %p29
      %p31 = scmp.ne.s32.totalorder %s23, %s26
      %p32 = scmp.eq.s32.totalorder %s13, 0
      %p33 = por %p31, %p32
      %p34 = scmp.ne.s32.totalorder %s23, %s26
      %p35 = scmp.eq.s32.totalorder %s18, 3
      %p36 = por %p34, %p35
      %p37 = scmp.ne.s32.totalorder %s26, %s27
      %p38 = scmp.eq.s32.totalorder %s18, 0
      %p39 = por %p37, %p38
      %p40 = scmp.ne.s32.totalorder %s26, %s27
      %p41 = scmp.eq.s32.totalorder %s19, 3
      %p42 = por %p40, %p41
      %p44 = scmp.ne.s32.totalorder %s27, %s43
      %p45 = scmp.eq.s32.totalorder %s19, 0
      %p46 = por %p44, %p45
      %s48 = sadd.s32 %s47, 1
      %p51 = scmp.eq.s32.totalorder %s13, 3
      %p52 = scmp.ne.s32.totalorder %s47, %s49
      %p53 = scmp.eq.s32.totalorder %s13, 0
      %p54 = por %p52, %p53
      %p55 = scmp.ne.s32.totalorder %s47, %s49
      %p56 = scmp.eq.s32.totalorder %s18, 3
      %p57 = por %p55, %p56
      %p58 = scmp.ne.s32.totalorder %s49, %s50
      %p59 = scmp.eq.s32.totalorder %s18, 0
      %p60 = por %p58, %p59
      %p61 = scmp.ne.s32.totalorder %s49, %s50
      %p62 = scmp.eq.s32.totalorder %s19, 3
      %p63 = por %p61, %p62
      %p65 = scmp.ne.s32.totalorder %s50, %s64
      %p66 = scmp.eq.s32.totalorder %s19, 0
      %p67 = por %p65, %p66
      %s69 = sadd.s32 %s68, 1
      %p72 = scmp.eq.s32.totalorder %s13, 3
      %p73 = scmp.ne.s32.totalorder %s68, %s70
      %p74 = scmp.eq.s32.totalorder %s13, 0
      %p75 = por %p73, %p74
      %p76 = scmp.ne.s32.totalorder %s68, %s70
      %p77 = scmp.eq.s32.totalorder %s18, 3
      %p78 = por %p76, %p77
      %p79 = scmp.ne.s32.totalorder %s70, %s71
      %p80 = scmp.eq.s32.totalorder %s18, 0
      %p81 = por %p79, %p80
      %p82 = scmp.ne.s32.totalorder %s70, %s71
      %p83 = scmp.eq.s32.totalorder %s19, 3
      %p84 = por %p82, %p83
      %p86 = scmp.ne.s32.totalorder %s71, %s85
      %p87 = scmp.eq.s32.totalorder %s19, 0
      %p88 = por %p86, %p87
      %s90 = sadd.s32 %s89, 1
      %p93 = scmp.eq.s32.totalorder %s13, 3
      %p94 = scmp.ne.s32.totalorder %s89, %s91
      %p95 = scmp.eq.s32.totalorder %s13, 0
      %p96 = por %p94, %p95
      %p97 = scmp.ne.s32.totalorder %s89, %s91
      %p98 = scmp.eq.s32.totalorder %s18, 3
      %p99 = por %p97, %p98
      %p100 = scmp.ne.s32.totalorder %s91, %s92
      %p101 = scmp.eq.s32.totalorder %s18, 0
      %p102 = por %p100, %p101
      %p103 = scmp.ne.s32.totalorder %s91, %s92
      %p104 = scmp.eq.s32.totalorder %s19, 3
      %p105 = por %p103, %p104
      %p107 = scmp.ne.s32.totalorder %s92, %s106
      %p108 = scmp.eq.s32.totalorder %s19, 0
      %p109 = por %p107, %p108
      %s110 = ssub.s32 %s13, %s20
      %p111 = scmp.eq.s32.totalorder %s110, 0
      %s113 = sadd.s32 %s112, 1
      %s114 = scalar_select %p111, %s112, %s113
      %p117 = pneg %p111
      %p118 = scmp.eq.s32.totalorder %s13, 3
      %p119 = por %p117, %p118
      %p120 = scmp.ne.s32.totalorder %s112, %s115
      %p121 = scmp.eq.s32.totalorder %s13, 0
      %p122 = por %p120, %p121
      %p123 = scmp.ne.s32.totalorder %s112, %s115
      %p124 = scmp.eq.s32.totalorder %s18, 3
      %p125 = por %p123, %p124
      %p126 = scmp.ne.s32.totalorder %s115, %s116
      %p127 = scmp.eq.s32.totalorder %s18, 0
      %p128 = por %p126, %p127
      %p129 = scmp.ne.s32.totalorder %s115, %s116
      %p130 = scmp.eq.s32.totalorder %s19, 3
      %p131 = por %p129, %p130
      %p133 = scmp.ne.s32.totalorder %s116, %s132
      %p134 = scmp.eq.s32.totalorder %s19, 0
      %p135 = por %p133, %p134
      %p136 = scmp.le.s32.totalorder 1, %s13
      %p137 = scmp.lt.s32.totalorder %s13, 5
      %p138 = pnand %p136, %p137
      %p139 = pneg %p138
      // Predicated region
      $region9: #{tpu_custom_call.1} parent=5 // pred_check
        _
      $region10: #{tpu_custom_call.1} parent=5 // pred_check_branch
        %141 = sbr.rel (%p138) target = $region12
      $region11: #{tpu_custom_call.1} parent=5 // pred_region
        %s142 = ssub.s32 %s13, 1
        // Predicated region
        $region13: #{tpu_custom_call.1} parent=11 // pred_check
          %p143 = pneg %p60
        $region14: #{tpu_custom_call.1} parent=11 // pred_check_branch
          %145 = sbr.rel (%p143) target = $region16
        $region15: #{tpu_custom_call.1} parent=11 // pred_region
          _
        $region16: #{tpu_custom_call.1} parent=11 // pred_fallthru
          _
        // Predicated region
        $region17: #{tpu_custom_call.1} parent=11 // pred_check
          %p146 = pneg %p81
        $region18: #{tpu_custom_call.1} parent=11 // pred_check_branch
          %148 = sbr.rel (%p146) target = $region20
        $region19: #{tpu_custom_call.1} parent=11 // pred_region
          _
        $region20: #{tpu_custom_call.1} parent=11 // pred_fallthru
          _
        // Predicated region
        $region21: #{tpu_custom_call.1} parent=11 // pred_check
          %p149 = pneg %p102
        $region22: #{tpu_custom_call.1} parent=11 // pred_check_branch
          %151 = sbr.rel (%p149) target = $region24
        $region23: #{tpu_custom_call.1} parent=11 // pred_region
          _
        $region24: #{tpu_custom_call.1} parent=11 // pred_fallthru
          _
      $region12: #{tpu_custom_call.1} parent=5 // pred_fallthru
        _
      %p152 = scmp.lt.s32.totalorder %s13, 4
      // Predicated region
      $region25: #{tpu_custom_call.1} parent=5 // pred_check
        %p153 = pneg %p152
      $region26: #{tpu_custom_call.1} parent=5 // pred_check_branch
        %155 = sbr.rel (%p153) target = $region28
      $region27: #{tpu_custom_call.1} parent=5 // pred_region
        // Predicated region
        $region29: #{tpu_custom_call.1} parent=27 // pred_check
          %p156 = pneg %p33
        $region30: #{tpu_custom_call.1} parent=27 // pred_check_branch
          %158 = sbr.rel (%p156) target = $region32
        $region31: #{tpu_custom_call.1} parent=27 // pred_region
          %s159 = smul.u32 16, %s13
          %p160 = scmp.lt.s32.totalorder %s159, 63
          %s161 = scalar_select %p160, %s159, 63
          %s162 = smul.addr %s161, 4
          %s163 = scalar_lea.vmem %s0, %s162
          %s164 = smul.u32 16, %s13
        $region32: #{tpu_custom_call.1} parent=27 // pred_fallthru
          _
      $region28: #{tpu_custom_call.1} parent=5 // pred_fallthru
        _
      %p165 = scmp.le.s32.totalorder 1, %s13
      %p166 = scmp.lt.s32.totalorder %s13, 5
      %p167 = pnand %p165, %p166
      %p168 = pneg %p167
      // Predicated region
      $region33: #{tpu_custom_call.1} parent=5 // pred_check
        _
      $region34: #{tpu_custom_call.1} parent=5 // pred_check_branch
        %170 = sbr.rel (%p167) target = $region36
      $region35: #{tpu_custom_call.1} parent=5 // pred_region
        %s171 = ssub.s32 %s13, 1
        %s172 = smul.u32 16, %s18
        %p173 = scmp.lt.s32.totalorder %s172, 63
        %s174 = scalar_select %p173, %s172, 63
        %s175 = smul.addr %s174, 4
        %s176 = scalar_lea.vmem %s0, %s175
        %p177 = pneg %p39
        %p178 = pneg %p36
        %p179 = pneg %p60
        %p180 = pneg %p57
        %p181 = pneg %p81
        %p182 = pneg %p78
        %p183 = pneg %p102
        %p184 = pneg %p99
        %p185 = pneg %p128
        %p186 = pneg %p125
        %s187 = sand.u32 %s115, 1
        %s188 = scalar_lea.sflag [#allocation3], %s187
        %s189 = sand.u32 %s115, 1
        %s190 = smul.addr %s189, 128
        %s191 = scalar_lea.vmem [#allocation2], %s190
        %s192 = smul.u32 16, %s18
        %p193 = scmp.lt.s32.totalorder %s192, 63
        %s194 = scalar_select %p193, %s192, 63
        %s195 = smul.addr %s194, 4
        %s196 = scalar_lea.vmem %s0, %s195
        %s197 = smul.u32 16, %s18
        %s198 = smul.u32 16, %s18
        %v200 = vld [vmem:[%s196] sm:$0xf]
        %v201 = vld [vmem:[%s196 + $0x4] sm:$0xf]
        %v202 = vld [vmem:[%s196 + $0x8] sm:$0xf]
        %v203 = vld [vmem:[%s196 + $0xc] sm:$0xf]
        %v204 = vld [vmem:[%s196 + $0x10] sm:$0xf]
        %v205 = vld [vmem:[%s196 + $0x14] sm:$0xf]
        %v206 = vld [vmem:[%s196 + $0x18] sm:$0xf]
        %v207 = vld [vmem:[%s196 + $0x1c] sm:$0xf]
        %v208 = vld [vmem:[%s196 + $0x20] sm:$0xf]
        %v209 = vld [vmem:[%s196 + $0x24] sm:$0xf]
        %v210 = vld [vmem:[%s196 + $0x28] sm:$0xf]
        %v211 = vld [vmem:[%s196 + $0x2c] sm:$0xf]
        %v212 = vld [vmem:[%s196 + $0x30] sm:$0xf]
        %v213 = vld [vmem:[%s196 + $0x34] sm:$0xf]
        %v214 = vld [vmem:[%s196 + $0x38] sm:$0xf]
        %v215 = vld [vmem:[%s196 + $0x3c] sm:$0xf]
        %v216 = vld [vmem:[%s1] sm:$0xf]
        %v217 = vld [vmem:[%s1 + $0x4] sm:$0xf]
        %v218 = vld [vmem:[%s1 + $0x8] sm:$0xf]
        %v219 = vld [vmem:[%s1 + $0xc] sm:$0xf]
        %v220 = vld [vmem:[%s1 + $0x10] sm:$0xf]
        %v221 = vld [vmem:[%s1 + $0x14] sm:$0xf]
        %v222 = vld [vmem:[%s1 + $0x18] sm:$0xf]
        %v223 = vld [vmem:[%s1 + $0x1c] sm:$0xf]
        %v224 = vld [vmem:[%s2] sm:$0x1]
        %v226 = vperm.slane %v224, 0
        %v244 = vunpack.c.l.b16 %v200
        %v245 = vunpack.c.l.b16 %v201
        %v246 = vunpack.c.l.b16 %v202
        %v247 = vunpack.c.l.b16 %v203
        %v248 = vunpack.c.l.b16 %v204
        %v249 = vunpack.c.l.b16 %v205
        %v250 = vunpack.c.l.b16 %v206
        %v251 = vunpack.c.l.b16 %v207
        %v252 = vunpack.c.l.b16 %v208
        %v253 = vunpack.c.l.b16 %v209
        %v254 = vunpack.c.l.b16 %v210
        %v255 = vunpack.c.l.b16 %v211
        %v256 = vunpack.c.l.b16 %v212
        %v257 = vunpack.c.l.b16 %v213
        %v258 = vunpack.c.l.b16 %v214
        %v259 = vunpack.c.l.b16 %v215
        %v260 = vpack.c.b16 %v245, %v244
        %v261 = vpack.c.b16 %v247, %v246
        %v262 = vpack.c.b16 %v249, %v248
        %v263 = vpack.c.b16 %v251, %v250
        %v264 = vpack.c.b16 %v253, %v252
        %v265 = vpack.c.b16 %v255, %v254
        %v266 = vpack.c.b16 %v257, %v256
        %v267 = vpack.c.b16 %v259, %v258
        %v276 = vunpack.c.l.b16 %v216
        %v277 = vunpack.c.l.b16 %v217
        %v278 = vunpack.c.l.b16 %v218
        %v279 = vunpack.c.l.b16 %v219
        %v280 = vunpack.c.l.b16 %v220
        %v281 = vunpack.c.l.b16 %v221
        %v282 = vunpack.c.l.b16 %v222
        %v283 = vunpack.c.l.b16 %v223
        %v284 = vpack.c.b16 %v277, %v276
        %v285 = vpack.c.b16 %v279, %v278
        %v286 = vpack.c.b16 %v281, %v280
        %v287 = vpack.c.b16 %v283, %v282
        %vm292 = vcmask 523264
        %v294 = vsel %vm292, %v260, 0
        %v297 = vsel %vm292, %v261, 0
        %v300 = vsel %vm292, %v262, 0
        %v303 = vsel %vm292, %v263, 0
        %v306 = vsel %vm292, %v264, 0
        %v309 = vsel %vm292, %v265, 0
        %v312 = vsel %vm292, %v266, 0
        %v315 = vsel %vm292, %v267, 0
        %317 = vmatpush.bf16.msra.mxu0 0
        %318 = vmatpush.bf16.msra.mxu0 0
        %319 = vmatpush.bf16.msra.mxu0 0
        %320 = vmatpush.bf16.msra.mxu0 0
        %321 = vmatpush.bf16.msra.mxu0 %v287
        %322 = vmatpush.bf16.msra.mxu0 %v286
        %323 = vmatpush.bf16.msra.mxu0 %v285
        %324 = vmatpush.bf16.msra.mxu0 %v284
        %325 = vmatmul.bf16.gmra.mxu0 %v294
        %v326 = vpop.f32.mrf.mxu0
        %v327 = vadd.f32 %v226, %v326
        %v328 = vpop.f32.mrf.mxu0
        %v329 = vadd.f32 %v226, %v328
        %330 = vmatmul.bf16.gmra.mxu0 %v297
        %v331 = vpop.f32.mrf.mxu0
        %v332 = vadd.f32 %v226, %v331
        %v333 = vpop.f32.mrf.mxu0
        %v334 = vadd.f32 %v226, %v333
        %335 = vmatmul.bf16.gmra.mxu0 %v300
        %v336 = vpop.f32.mrf.mxu0
        %v337 = vadd.f32 %v226, %v336
        %v338 = vpop.f32.mrf.mxu0
        %v339 = vadd.f32 %v226, %v338
        %340 = vmatmul.bf16.gmra.mxu0 %v303
        %v341 = vpop.f32.mrf.mxu0
        %v342 = vadd.f32 %v226, %v341
        %v343 = vpop.f32.mrf.mxu0
        %v344 = vadd.f32 %v226, %v343
        %345 = vmatmul.bf16.gmra.mxu0 %v306
        %v346 = vpop.f32.mrf.mxu0
        %v347 = vadd.f32 %v226, %v346
        %v348 = vpop.f32.mrf.mxu0
        %v349 = vadd.f32 %v226, %v348
        %350 = vmatmul.bf16.gmra.mxu0 %v309
        %v351 = vpop.f32.mrf.mxu0
        %v352 = vadd.f32 %v226, %v351
        %v353 = vpop.f32.mrf.mxu0
        %v354 = vadd.f32 %v226, %v353
        %355 = vmatmul.bf16.gmra.mxu0 %v312
        %v356 = vpop.f32.mrf.mxu0
        %v357 = vadd.f32 %v226, %v356
        %v358 = vpop.f32.mrf.mxu0
        %v359 = vadd.f32 %v226, %v358
        %360 = vmatmul.bf16.gmra.mxu0 %v315
        %v361 = vpop.f32.mrf.mxu0
        %v362 = vadd.f32 %v226, %v361
        %v363 = vpop.f32.mrf.mxu0
        %v364 = vadd.f32 %v226, %v363
        %365 = vdwg.mxu0
        %v366 = vmax.f32 %v327, 0.0
        %v367 = vmax.f32 %v329, 0.0
        %v368 = vmax.f32 %v332, 0.0
        %v369 = vmax.f32 %v334, 0.0
        %v370 = vmax.f32 %v337, 0.0
        %v371 = vmax.f32 %v339, 0.0
        %v372 = vmax.f32 %v342, 0.0
        %v373 = vmax.f32 %v344, 0.0
        %v374 = vmax.f32 %v347, 0.0
        %v375 = vmax.f32 %v349, 0.0
        %v376 = vmax.f32 %v352, 0.0
        %v377 = vmax.f32 %v354, 0.0
        %v378 = vmax.f32 %v357, 0.0
        %v379 = vmax.f32 %v359, 0.0
        %v380 = vmax.f32 %v362, 0.0
        %v381 = vmax.f32 %v364, 0.0
        %v382 = vld [vmem:[%s3] sm:$0xff]
        %v383 = vadd.f32 %v366, %v382
        %v384 = vadd.f32 %v367, %v382
        %v385 = vadd.f32 %v368, %v382
        %v386 = vadd.f32 %v369, %v382
        %v387 = vadd.f32 %v370, %v382
        %v388 = vadd.f32 %v371, %v382
        %v389 = vadd.f32 %v372, %v382
        %v390 = vadd.f32 %v373, %v382
        %v391 = vadd.f32 %v374, %v382
        %v392 = vadd.f32 %v375, %v382
        %v393 = vadd.f32 %v376, %v382
        %v394 = vadd.f32 %v377, %v382
        %v395 = vadd.f32 %v378, %v382
        %v396 = vadd.f32 %v379, %v382
        %v397 = vadd.f32 %v380, %v382
        %v398 = vadd.f32 %v381, %v382
        %399 = vst [vmem:[%s191] sm:$0xff] %v383
        %400 = vst [vmem:[%s191 + $0x8] sm:$0xff] %v384
        %401 = vst [vmem:[%s191 + $0x10] sm:$0xff] %v385
        %402 = vst [vmem:[%s191 + $0x18] sm:$0xff] %v386
        %403 = vst [vmem:[%s191 + $0x20] sm:$0xff] %v387
        %404 = vst [vmem:[%s191 + $0x28] sm:$0xff] %v388
        %405 = vst [vmem:[%s191 + $0x30] sm:$0xff] %v389
        %406 = vst [vmem:[%s191 + $0x38] sm:$0xff] %v390
        %407 = vst [vmem:[%s191 + $0x40] sm:$0xff] %v391
        %408 = vst [vmem:[%s191 + $0x48] sm:$0xff] %v392
        %409 = vst [vmem:[%s191 + $0x50] sm:$0xff] %v393
        %410 = vst [vmem:[%s191 + $0x58] sm:$0xff] %v394
        %411 = vst [vmem:[%s191 + $0x60] sm:$0xff] %v395
        %412 = vst [vmem:[%s191 + $0x68] sm:$0xff] %v396
        %413 = vst [vmem:[%s191 + $0x70] sm:$0xff] %v397
        %414 = vst [vmem:[%s191 + $0x78] sm:$0xff] %v398
        %s415 = sand.u32 %s115, 1
        %s416 = scalar_lea.sflag [#allocation3], %s415
        %s417 = sand.u32 %s115, 1
        %s418 = smul.addr %s417, 128
        %s419 = scalar_lea.vmem [#allocation2], %s418
        // Predicated region
        $region37: #{tpu_custom_call.1} parent=35 // pred_check
          %p420 = pneg %p125
        $region38: #{tpu_custom_call.1} parent=35 // pred_check_branch
          %422 = sbr.rel (%p420) target = $region40
        $region39: #{tpu_custom_call.1} parent=35 // pred_region
          %s423 = smul.u32 16, %s18
          %425 = vsyncadd %s416, 0
          %s426 = smul.addr %s423, 8
          %s427 = scalar_lea.hbm %s4, %s426
          %s428 = sshll.u32 %s419, 4
          %s429 = int_to_ptr.vmem [resolvable:$true] %s428
          %s430 = sshll.u32 %s427, 4
          %s431 = int_to_ptr.hbm [resolvable:$true] %s430
          %436 = dma.vmem_to_hbm [thread:$0]  %s429, 2048, %s431, %s416, 128, 128, 8
        $region40: #{tpu_custom_call.1} parent=35 // pred_fallthru
          _
      $region36: #{tpu_custom_call.1} parent=5 // pred_fallthru
        _
      %p437 = scmp.le.s32.totalorder 2, %s13
      // Predicated region
      $region41: #{tpu_custom_call.1} parent=5 // pred_check
        %p438 = pneg %p437
      $region42: #{tpu_custom_call.1} parent=5 // pred_check_branch
        %440 = sbr.rel (%p438) target = $region44
      $region43: #{tpu_custom_call.1} parent=5 // pred_region
        %s441 = ssub.s32 %s13, 2
        // Predicated region
        $region45: #{tpu_custom_call.1} parent=43 // pred_check
          %p442 = pneg %p131
        $region46: #{tpu_custom_call.1} parent=43 // pred_check_branch
          %444 = sbr.rel (%p442) target = $region48
        $region47: #{tpu_custom_call.1} parent=43 // pred_region
          %s445 = sand.u32 %s116, 1
          %s446 = scalar_lea.sflag [#allocation3], %s445
          %s447 = sand.u32 %s116, 1
          %s448 = smul.addr %s447, 128
          %s449 = scalar_lea.vmem [#allocation2], %s448
          %451 = dma.done %s446, 2048
        $region48: #{tpu_custom_call.1} parent=43 // pred_fallthru
          _
      $region44: #{tpu_custom_call.1} parent=5 // pred_fallthru
        _
    $region6: #{tpu_custom_call.1} parent=1 // loop_footer
      %s17 = sadd.s32 1, %s13
    $region7: #{tpu_custom_call.1} parent=1 // loop_footer_branch
      %12 = sbr.rel target = $region3
    $region8: #{tpu_custom_call.1} parent=1 // loop_exit
      _
    %452 = vsyncpa [#allocation3], 1
    %s453 = scalar_lea.sflag [#allocation3], 1
    %454 = vsyncpa %s453, 1

</llo_original>
